<compile_context>
chip_gen: v7x
topology: tpu7x:2x2x1
jax: 0.10.0
libtpu: 0.0.40
codegen_flags: <defaults>
</compile_context>

<pallas_src>
import math

import jax
import jax.numpy as jnp
from jax import lax
from jax.experimental import pallas as pl
from jax.experimental.pallas import tpu as pltpu


# ---------------------------------------------------------------------------
# Kernel 1: QKV projection + head split (+ query scaling).
# ---------------------------------------------------------------------------
def _qkv_proj_kernel(x_ref, w_ref, b_ref, q_ref, k_ref, v_ref):
    # x_ref:   (1, TM, C)  f32 block
    # w_ref:   (C, 3C)     bf16, whole array resident in VMEM (no double buffer)
    # b_ref:   (1, 3C)     f32,  whole array resident in VMEM
    # q/k/v_ref: (1, H, TM, D) bf16 output blocks
    n_head = q_ref.shape[1]
    head_dim = q_ref.shape[3]
    C = n_head * head_dim
    scale = 1.0 / math.sqrt(head_dim)

    x = x_ref[0].astype(jnp.bfloat16)                        # (TM, C) bf16 MXU operand
    qkv = jnp.dot(x, w_ref[...],
                  preferred_element_type=jnp.float32)        # (TM, 3C) f32 accum
    qkv = qkv + b_ref[...]

    # Head split via static lane slices; happens once per sequence tile,
    # outside the attention inner loop.  1/sqrt(D) folded into q in f32.
    for h in range(n_head):
        lo = h * head_dim
        q_ref[0, h] = (qkv[:, lo:lo + head_dim] * scale).astype(q_ref.dtype)
        k_ref[0, h] = qkv[:, C + lo:C + lo + head_dim].astype(k_ref.dtype)
        v_ref[0, h] = qkv[:, 2 * C + lo:2 * C + lo + head_dim].astype(v_ref.dtype)


# ---------------------------------------------------------------------------
# Kernel 2: flash attention (all heads batched) + output projection.
# grid = (B, T//TQ, T//TK); KV axis innermost / "arbitrary"; scratch persists
# across KV tiles for a fixed (batch, query-tile).
# ---------------------------------------------------------------------------
def _flash_attn_kernel(q_ref, k_ref, v_ref, wp_ref, bp_ref, o_ref,
                       m_sc, l_sc, acc_sc):
    qi = pl.program_id(1)
    ki = pl.program_id(2)
    n_head = q_ref.shape[1]
    tq = q_ref.shape[2]
    tk = k_ref.shape[2]

    @pl.when(ki == 0)
    def _init():
        m_sc[...] = jnp.full_like(m_sc, -jnp.inf)
        l_sc[...] = jnp.zeros_like(l_sc)
        acc_sc[...] = jnp.zeros_like(acc_sc)

    # Skip KV tiles that lie entirely above the causal diagonal.
    @pl.when(ki * tk <= qi * tq + (tq - 1))
    def _compute():
        q = q_ref[0]                                          # (H, TQ, D) bf16
        k = k_ref[0]                                          # (H, TK, D) bf16
        v = v_ref[0]                                          # (H, TK, D) bf16

        # Batched-over-heads QK^T: one MXU contraction, no per-head loop or
        # explicit transpose.  q already carries the 1/sqrt(D) scale.
        s = jnp.einsum('hqd,hkd->hqk', q, k,
                       preferred_element_type=jnp.float32)    # (H, TQ, TK) f32

        row = qi * tq + lax.broadcasted_iota(jnp.int32, (tq, tk), 0)
        col = ki * tk + lax.broadcasted_iota(jnp.int32, (tq, tk), 1)
        s = jnp.where((row >= col)[None, :, :], s, jnp.float32(-1e30))

        m_prev = m_sc[...]                                    # (H, TQ, 1)
        m_new = jnp.maximum(m_prev, jnp.max(s, axis=-1, keepdims=True))
        alpha = jnp.exp(m_prev - m_new)
        p = jnp.exp(s - m_new)                                # (H, TQ, TK) f32

        l_sc[...] = alpha * l_sc[...] + jnp.sum(p, axis=-1, keepdims=True)
        acc_sc[...] = alpha * acc_sc[...] + jnp.einsum(
            'hqk,hkd->hqd', p.astype(v.dtype), v,
            preferred_element_type=jnp.float32)
        m_sc[...] = m_new

    @pl.when(ki == pl.num_programs(2) - 1)
    def _finalize():
        # Softmax normalization: EUP reciprocal + multiply instead of divide.
        inv_l = pl.reciprocal(l_sc[...], approx=True)         # (H, TQ, 1)
        y = acc_sc[...] * inv_l                               # (H, TQ, D) f32
        # Merge heads once per query tile (not per KV step).
        y = jnp.concatenate([y[h] for h in range(n_head)], axis=-1)  # (TQ, C)
        out = jnp.dot(y.astype(jnp.bfloat16), wp_ref[...],
                      preferred_element_type=jnp.float32)
        out = out + bp_ref[...]
        o_ref[0] = out.astype(o_ref.dtype)


# ---------------------------------------------------------------------------
# Wrapper.
# ---------------------------------------------------------------------------
def causal_self_attention(x, w_attn, b_attn, w_proj, b_proj, *, n_head,
                          tile_q=128, tile_k=128):
    """x: (B,T,C). w_attn: (C,3C), b_attn: (1,3C), w_proj: (C,C), b_proj: (1,C)."""
    B, T, C = x.shape
    assert C % n_head == 0
    D = C // n_head

    tq = min(tile_q, T)
    tk = min(tile_k, T)
    assert T % tq == 0 and T % tk == 0
    tm = tq  # sequence tile for the projection kernel

    # bf16 MXU operands (f32 accumulation in-kernel); biases stay f32.
    w_attn_bf = w_attn.astype(jnp.bfloat16)
    w_proj_bf = w_proj.astype(jnp.bfloat16)

    # Headroom under v7x's 64 MiB physical VMEM; also raises v5e's 16 MiB default.
    vmem_limit = 48 * 1024 * 1024

    # ---- Kernel 1: QKV projection -> (B, H, T, D) bf16 q/k/v ----------------
    qkv_shape = jax.ShapeDtypeStruct((B, n_head, T, D), jnp.bfloat16)
    proj_cost = pl.CostEstimate(
        flops=2 * B * T * C * 3 * C,
        transcendentals=0,
        bytes_accessed=(B * T * C * 4 + C * 3 * C * 2 + 3 * C * 4
                        + 3 * B * n_head * T * D * 2))

    q, k, v = pl.pallas_call(
        _qkv_proj_kernel,
        out_shape=(qkv_shape, qkv_shape, qkv_shape),
        grid_spec=pltpu.PrefetchScalarGridSpec(
            num_scalar_prefetch=0,
            grid=(B, T // tm),
            in_specs=[
                pl.BlockSpec((1, tm, C), lambda b, i: (b, i, 0)),
                # Constant operands: whole-array VMEM residency, single-buffered.
                pl.BlockSpec(memory_space=pltpu.MemorySpace.VMEM),
                pl.BlockSpec(memory_space=pltpu.MemorySpace.VMEM),
            ],
            out_specs=(
                pl.BlockSpec((1, n_head, tm, D), lambda b, i: (b, 0, i, 0)),
                pl.BlockSpec((1, n_head, tm, D), lambda b, i: (b, 0, i, 0)),
                pl.BlockSpec((1, n_head, tm, D), lambda b, i: (b, 0, i, 0)),
            ),
        ),
        compiler_params=pltpu.CompilerParams(
            dimension_semantics=("parallel", "parallel"),
            vmem_limit_bytes=vmem_limit),
        cost_estimate=proj_cost,
    )(x, w_attn_bf, b_attn)

    # ---- Kernel 2: flash attention + output projection ----------------------
    attn_cost = pl.CostEstimate(
        flops=B * (4 * T * T * C + 2 * T * C * C),
        transcendentals=B * n_head * T * T,
        bytes_accessed=(3 * B * n_head * T * D * 2 + C * C * 2 + C * 4
                        + B * T * C * 4))

    out = pl.pallas_call(
        _flash_attn_kernel,
        out_shape=jax.ShapeDtypeStruct((B, T, C), x.dtype),
        grid_spec=pltpu.PrefetchScalarGridSpec(
            num_scalar_prefetch=0,
            grid=(B, T // tq, T // tk),
            in_specs=[
                pl.BlockSpec((1, n_head, tq, D), lambda b, i, j: (b, 0, i, 0)),
                pl.BlockSpec((1, n_head, tk, D), lambda b, i, j: (b, 0, j, 0)),
                pl.BlockSpec((1, n_head, tk, D), lambda b, i, j: (b, 0, j, 0)),
                pl.BlockSpec(memory_space=pltpu.MemorySpace.VMEM),
                pl.BlockSpec(memory_space=pltpu.MemorySpace.VMEM),
            ],
            out_specs=pl.BlockSpec((1, tq, C), lambda b, i, j: (b, i, 0)),
            scratch_shapes=[
                pltpu.VMEM((n_head, tq, 1), jnp.float32),   # running max m
                pltpu.VMEM((n_head, tq, 1), jnp.float32),   # running sum l
                pltpu.VMEM((n_head, tq, D), jnp.float32),   # output accumulator
            ],
        ),
        compiler_params=pltpu.CompilerParams(
            dimension_semantics=("parallel", "parallel", "arbitrary"),
            vmem_limit_bytes=vmem_limit),
        cost_estimate=attn_cost,
    )(q, k, v, w_proj_bf, b_proj)

    return out


# ---------------------------------------------------------------------------
# Plain-JAX reference mirroring the PyTorch forward (f32 everywhere).
# ---------------------------------------------------------------------------
def reference_attention(x, w_attn, b_attn, w_proj, b_proj, *, n_head):
    B, T, C = x.shape
    D = C // n_head
    qkv = jnp.einsum('btc,cd->btd', x, w_attn) + b_attn[0]
    q, k, v = jnp.split(qkv, 3, axis=-1)
    q = q.reshape(B, T, n_head, D).transpose(0, 2, 1, 3)
    k = k.reshape(B, T, n_head, D).transpose(0, 2, 1, 3)
    v = v.reshape(B, T, n_head, D).transpose(0, 2, 1, 3)
    s = jnp.einsum('bhqd,bhkd->bhqk', q, k) / math.sqrt(D)
    mask = jnp.tril(jnp.ones((T, T), dtype=bool))
    s = jnp.where(mask, s, -jnp.inf)
    p = jax.nn.softmax(s, axis=-1)
    y = jnp.einsum('bhqk,bhkd->bhqd', p, v)
    y = y.transpose(0, 2, 1, 3).reshape(B, T, C)
    return jnp.einsum('btc,cd->btd', y, w_proj) + b_proj[0]


if __name__ == "__main__":
    # Small config consistent with the module: n_embd divisible by n_head.
    B, T, n_embd, n_head = 2, 8, 32, 4

    key = jax.random.PRNGKey(0)
    k_x, k_wa, k_ba, k_wp, k_bp = jax.random.split(key, 5)

    x = jax.random.normal(k_x, (B, T, n_embd), dtype=jnp.float32)

    # Deterministic parameter init (synthetic; GPT-style 0.02 std).
    # Weights stored as (in_features, out_features) — i.e. PyTorch W.T.
    w_attn = 0.02 * jax.random.normal(k_wa, (n_embd, 3 * n_embd), dtype=jnp.float32)
    b_attn = 0.02 * jax.random.normal(k_ba, (1, 3 * n_embd), dtype=jnp.float32)
    w_proj = 0.02 * jax.random.normal(k_wp, (n_embd, n_embd), dtype=jnp.float32)
    b_proj = 0.02 * jax.random.normal(k_bp, (1, n_embd), dtype=jnp.float32)

    out = causal_self_attention(x, w_attn, b_attn, w_proj, b_proj, n_head=n_head)
    out = jax.block_until_ready(out)

    ref = reference_attention(x, w_attn, b_attn, w_proj, b_proj, n_head=n_head)
    assert out.shape == (B, T, n_embd)
    # bf16 MXU operands (f32 accumulation) vs pure-f32 reference -> loosened tolerance.
    assert jnp.allclose(out, ref, atol=2e-2, rtol=2e-2), "Pallas kernel mismatch vs reference"

    print("KERNEL_OK")
</pallas_src>

<mosaic_0001>
module attributes {stable_mosaic.version = 11 : i64} {
  func.func @_qkv_proj_kernel(%arg0: i32, %arg1: i32, %arg2: memref<1x8x32xf32, #tpu.memory_space<vmem>>, %arg3: memref<32x96xbf16, #tpu.memory_space<vmem>>, %arg4: memref<1x96xf32, #tpu.memory_space<vmem>>, %arg5: memref<1x4x8x8xbf16, #tpu.memory_space<vmem>>, %arg6: memref<1x4x8x8xbf16, #tpu.memory_space<vmem>>, %arg7: memref<1x4x8x8xbf16, #tpu.memory_space<vmem>>) attributes {dimension_semantics = [#tpu.dimension_semantics<parallel>, #tpu.dimension_semantics<parallel>], iteration_bounds = array<i64: 2, 1>, scalar_prefetch = 0 : i64, scratch_operands = 0 : i64, tpu.core_type = #tpu.core_type<tc>, window_params = [{transform_indices = @transform_0, window_bounds = array<i64: 1, 8, 32>}, {pipeline_mode = #tpu.pipeline_mode<synchronous>, transform_indices = @transform_1, window_bounds = array<i64: 32, 96>}, {pipeline_mode = #tpu.pipeline_mode<synchronous>, transform_indices = @transform_2, window_bounds = array<i64: 1, 96>}, {transform_indices = @transform_3, window_bounds = array<i64: 1, 4, 8, 8>}, {transform_indices = @transform_4, window_bounds = array<i64: 1, 4, 8, 8>}, {transform_indices = @transform_5, window_bounds = array<i64: 1, 4, 8, 8>}]} {
    %c0 = arith.constant 0 : index
    %c0_0 = arith.constant 0 : index
    %c0_1 = arith.constant 0 : index
    %0 = vector.load %arg2[%c0, %c0_0, %c0_1] : memref<1x8x32xf32, #tpu.memory_space<vmem>>, vector<1x8x32xf32>
    %1 = vector.shape_cast %0 : vector<1x8x32xf32> to vector<8x32xf32>
    %2 = arith.truncf %1 : vector<8x32xf32> to vector<8x32xbf16>
    %c0_2 = arith.constant 0 : index
    %c0_3 = arith.constant 0 : index
    %3 = vector.load %arg3[%c0_2, %c0_3] : memref<32x96xbf16, #tpu.memory_space<vmem>>, vector<32x96xbf16>
    %cst = arith.constant dense<0.000000e+00> : vector<8x96xf32>
    %4 = tpu.matmul %2, %3, %cst {dimension_numbers = #tpu.dot_dimension_numbers<[1], [0], [0], [1], [0, 0, 1, 1], [], []>} : vector<8x32xbf16>, vector<32x96xbf16>, vector<8x96xf32> -> vector<8x96xf32>
    %c0_4 = arith.constant 0 : index
    %c0_5 = arith.constant 0 : index
    %5 = vector.load %arg4[%c0_4, %c0_5] : memref<1x96xf32, #tpu.memory_space<vmem>>, vector<1x96xf32>
    %6 = vector.broadcast %5 : vector<1x96xf32> to vector<8x96xf32>
    %7 = arith.addf %4, %6 : vector<8x96xf32>
    %8 = vector.extract_strided_slice %7 {offsets = [0, 0], sizes = [8, 8], strides = [1, 1]} : vector<8x96xf32> to vector<8x8xf32>
    %cst_6 = arith.constant 0.353553385 : f32
    %9 = vector.broadcast %cst_6 : f32 to vector<8x8xf32>
    %10 = arith.mulf %8, %9 : vector<8x8xf32>
    %11 = arith.truncf %10 : vector<8x8xf32> to vector<8x8xbf16>
    %c0_7 = arith.constant 0 : index
    %c0_8 = arith.constant 0 : index
    %c0_9 = arith.constant 0 : index
    %c0_10 = arith.constant 0 : index
    %12 = vector.load %arg5[%c0_7, %c0_8, %c0_9, %c0_10] : memref<1x4x8x8xbf16, #tpu.memory_space<vmem>>, vector<1x1x8x8xbf16>
    %13 = vector.shape_cast %12 : vector<1x1x8x8xbf16> to vector<8x8xbf16>
    %14 = vector.shape_cast %11 : vector<8x8xbf16> to vector<1x1x8x8xbf16>
    tpu.vector_store %arg5[%c0_7, %c0_8, %c0_9, %c0_10], %14 {strides = array<i32>} : memref<1x4x8x8xbf16, #tpu.memory_space<vmem>>, vector<1x1x8x8xbf16>,
    %15 = vector.extract_strided_slice %7 {offsets = [0, 32], sizes = [8, 8], strides = [1, 1]} : vector<8x96xf32> to vector<8x8xf32>
    %16 = arith.truncf %15 : vector<8x8xf32> to vector<8x8xbf16>
    %c0_11 = arith.constant 0 : index
    %c0_12 = arith.constant 0 : index
    %c0_13 = arith.constant 0 : index
    %c0_14 = arith.constant 0 : index
    %17 = vector.load %arg6[%c0_11, %c0_12, %c0_13, %c0_14] : memref<1x4x8x8xbf16, #tpu.memory_space<vmem>>, vector<1x1x8x8xbf16>
    %18 = vector.shape_cast %17 : vector<1x1x8x8xbf16> to vector<8x8xbf16>
    %19 = vector.shape_cast %16 : vector<8x8xbf16> to vector<1x1x8x8xbf16>
    tpu.vector_store %arg6[%c0_11, %c0_12, %c0_13, %c0_14], %19 {strides = array<i32>} : memref<1x4x8x8xbf16, #tpu.memory_space<vmem>>, vector<1x1x8x8xbf16>,
    %20 = vector.extract_strided_slice %7 {offsets = [0, 64], sizes = [8, 8], strides = [1, 1]} : vector<8x96xf32> to vector<8x8xf32>
    %21 = arith.truncf %20 : vector<8x8xf32> to vector<8x8xbf16>
    %c0_15 = arith.constant 0 : index
    %c0_16 = arith.constant 0 : index
    %c0_17 = arith.constant 0 : index
    %c0_18 = arith.constant 0 : index
    %22 = vector.load %arg7[%c0_15, %c0_16, %c0_17, %c0_18] : memref<1x4x8x8xbf16, #tpu.memory_space<vmem>>, vector<1x1x8x8xbf16>
    %23 = vector.shape_cast %22 : vector<1x1x8x8xbf16> to vector<8x8xbf16>
    %24 = vector.shape_cast %21 : vector<8x8xbf16> to vector<1x1x8x8xbf16>
    tpu.vector_store %arg7[%c0_15, %c0_16, %c0_17, %c0_18], %24 {strides = array<i32>} : memref<1x4x8x8xbf16, #tpu.memory_space<vmem>>, vector<1x1x8x8xbf16>,
    %25 = vector.extract_strided_slice %7 {offsets = [0, 8], sizes = [8, 8], strides = [1, 1]} : vector<8x96xf32> to vector<8x8xf32>
    %cst_19 = arith.constant 0.353553385 : f32
    %26 = vector.broadcast %cst_19 : f32 to vector<8x8xf32>
    %27 = arith.mulf %25, %26 : vector<8x8xf32>
    %28 = arith.truncf %27 : vector<8x8xf32> to vector<8x8xbf16>
    %c0_20 = arith.constant 0 : index
    %c1 = arith.constant 1 : index
    %c0_21 = arith.constant 0 : index
    %c0_22 = arith.constant 0 : index
    %29 = vector.load %arg5[%c0_20, %c1, %c0_21, %c0_22] : memref<1x4x8x8xbf16, #tpu.memory_space<vmem>>, vector<1x1x8x8xbf16>
    %30 = vector.shape_cast %29 : vector<1x1x8x8xbf16> to vector<8x8xbf16>
    %31 = vector.shape_cast %28 : vector<8x8xbf16> to vector<1x1x8x8xbf16>
    tpu.vector_store %arg5[%c0_20, %c1, %c0_21, %c0_22], %31 {strides = array<i32>} : memref<1x4x8x8xbf16, #tpu.memory_space<vmem>>, vector<1x1x8x8xbf16>,
    %32 = vector.extract_strided_slice %7 {offsets = [0, 40], sizes = [8, 8], strides = [1, 1]} : vector<8x96xf32> to vector<8x8xf32>
    %33 = arith.truncf %32 : vector<8x8xf32> to vector<8x8xbf16>
    %c0_23 = arith.constant 0 : index
    %c1_24 = arith.constant 1 : index
    %c0_25 = arith.constant 0 : index
    %c0_26 = arith.constant 0 : index
    %34 = vector.load %arg6[%c0_23, %c1_24, %c0_25, %c0_26] : memref<1x4x8x8xbf16, #tpu.memory_space<vmem>>, vector<1x1x8x8xbf16>
    %35 = vector.shape_cast %34 : vector<1x1x8x8xbf16> to vector<8x8xbf16>
    %36 = vector.shape_cast %33 : vector<8x8xbf16> to vector<1x1x8x8xbf16>
    tpu.vector_store %arg6[%c0_23, %c1_24, %c0_25, %c0_26], %36 {strides = array<i32>} : memref<1x4x8x8xbf16, #tpu.memory_space<vmem>>, vector<1x1x8x8xbf16>,
    %37 = vector.extract_strided_slice %7 {offsets = [0, 72], sizes = [8, 8], strides = [1, 1]} : vector<8x96xf32> to vector<8x8xf32>
    %38 = arith.truncf %37 : vector<8x8xf32> to vector<8x8xbf16>
    %c0_27 = arith.constant 0 : index
    %c1_28 = arith.constant 1 : index
    %c0_29 = arith.constant 0 : index
    %c0_30 = arith.constant 0 : index
    %39 = vector.load %arg7[%c0_27, %c1_28, %c0_29, %c0_30] : memref<1x4x8x8xbf16, #tpu.memory_space<vmem>>, vector<1x1x8x8xbf16>
    %40 = vector.shape_cast %39 : vector<1x1x8x8xbf16> to vector<8x8xbf16>
    %41 = vector.shape_cast %38 : vector<8x8xbf16> to vector<1x1x8x8xbf16>
    tpu.vector_store %arg7[%c0_27, %c1_28, %c0_29, %c0_30], %41 {strides = array<i32>} : memref<1x4x8x8xbf16, #tpu.memory_space<vmem>>, vector<1x1x8x8xbf16>,
    %42 = vector.extract_strided_slice %7 {offsets = [0, 16], sizes = [8, 8], strides = [1, 1]} : vector<8x96xf32> to vector<8x8xf32>
    %cst_31 = arith.constant 0.353553385 : f32
    %43 = vector.broadcast %cst_31 : f32 to vector<8x8xf32>
    %44 = arith.mulf %42, %43 : vector<8x8xf32>
    %45 = arith.truncf %44 : vector<8x8xf32> to vector<8x8xbf16>
    %c0_32 = arith.constant 0 : index
    %c2 = arith.constant 2 : index
    %c0_33 = arith.constant 0 : index
    %c0_34 = arith.constant 0 : index
    %46 = vector.load %arg5[%c0_32, %c2, %c0_33, %c0_34] : memref<1x4x8x8xbf16, #tpu.memory_space<vmem>>, vector<1x1x8x8xbf16>
    %47 = vector.shape_cast %46 : vector<1x1x8x8xbf16> to vector<8x8xbf16>
    %48 = vector.shape_cast %45 : vector<8x8xbf16> to vector<1x1x8x8xbf16>
    tpu.vector_store %arg5[%c0_32, %c2, %c0_33, %c0_34], %48 {strides = array<i32>} : memref<1x4x8x8xbf16, #tpu.memory_space<vmem>>, vector<1x1x8x8xbf16>,
    %49 = vector.extract_strided_slice %7 {offsets = [0, 48], sizes = [8, 8], strides = [1, 1]} : vector<8x96xf32> to vector<8x8xf32>
    %50 = arith.truncf %49 : vector<8x8xf32> to vector<8x8xbf16>
    %c0_35 = arith.constant 0 : index
    %c2_36 = arith.constant 2 : index
    %c0_37 = arith.constant 0 : index
    %c0_38 = arith.constant 0 : index
    %51 = vector.load %arg6[%c0_35, %c2_36, %c0_37, %c0_38] : memref<1x4x8x8xbf16, #tpu.memory_space<vmem>>, vector<1x1x8x8xbf16>
    %52 = vector.shape_cast %51 : vector<1x1x8x8xbf16> to vector<8x8xbf16>
    %53 = vector.shape_cast %50 : vector<8x8xbf16> to vector<1x1x8x8xbf16>
    tpu.vector_store %arg6[%c0_35, %c2_36, %c0_37, %c0_38], %53 {strides = array<i32>} : memref<1x4x8x8xbf16, #tpu.memory_space<vmem>>, vector<1x1x8x8xbf16>,
    %54 = vector.extract_strided_slice %7 {offsets = [0, 80], sizes = [8, 8], strides = [1, 1]} : vector<8x96xf32> to vector<8x8xf32>
    %55 = arith.truncf %54 : vector<8x8xf32> to vector<8x8xbf16>
    %c0_39 = arith.constant 0 : index
    %c2_40 = arith.constant 2 : index
    %c0_41 = arith.constant 0 : index
    %c0_42 = arith.constant 0 : index
    %56 = vector.load %arg7[%c0_39, %c2_40, %c0_41, %c0_42] : memref<1x4x8x8xbf16, #tpu.memory_space<vmem>>, vector<1x1x8x8xbf16>
    %57 = vector.shape_cast %56 : vector<1x1x8x8xbf16> to vector<8x8xbf16>
    %58 = vector.shape_cast %55 : vector<8x8xbf16> to vector<1x1x8x8xbf16>
    tpu.vector_store %arg7[%c0_39, %c2_40, %c0_41, %c0_42], %58 {strides = array<i32>} : memref<1x4x8x8xbf16, #tpu.memory_space<vmem>>, vector<1x1x8x8xbf16>,
    %59 = vector.extract_strided_slice %7 {offsets = [0, 24], sizes = [8, 8], strides = [1, 1]} : vector<8x96xf32> to vector<8x8xf32>
    %cst_43 = arith.constant 0.353553385 : f32
    %60 = vector.broadcast %cst_43 : f32 to vector<8x8xf32>
    %61 = arith.mulf %59, %60 : vector<8x8xf32>
    %62 = arith.truncf %61 : vector<8x8xf32> to vector<8x8xbf16>
    %c0_44 = arith.constant 0 : index
    %c3 = arith.constant 3 : index
    %c0_45 = arith.constant 0 : index
    %c0_46 = arith.constant 0 : index
    %63 = vector.load %arg5[%c0_44, %c3, %c0_45, %c0_46] : memref<1x4x8x8xbf16, #tpu.memory_space<vmem>>, vector<1x1x8x8xbf16>
    %64 = vector.shape_cast %63 : vector<1x1x8x8xbf16> to vector<8x8xbf16>
    %65 = vector.shape_cast %62 : vector<8x8xbf16> to vector<1x1x8x8xbf16>
    tpu.vector_store %arg5[%c0_44, %c3, %c0_45, %c0_46], %65 {strides = array<i32>} : memref<1x4x8x8xbf16, #tpu.memory_space<vmem>>, vector<1x1x8x8xbf16>,
    %66 = vector.extract_strided_slice %7 {offsets = [0, 56], sizes = [8, 8], strides = [1, 1]} : vector<8x96xf32> to vector<8x8xf32>
    %67 = arith.truncf %66 : vector<8x8xf32> to vector<8x8xbf16>
    %c0_47 = arith.constant 0 : index
    %c3_48 = arith.constant 3 : index
    %c0_49 = arith.constant 0 : index
    %c0_50 = arith.constant 0 : index
    %68 = vector.load %arg6[%c0_47, %c3_48, %c0_49, %c0_50] : memref<1x4x8x8xbf16, #tpu.memory_space<vmem>>, vector<1x1x8x8xbf16>
    %69 = vector.shape_cast %68 : vector<1x1x8x8xbf16> to vector<8x8xbf16>
    %70 = vector.shape_cast %67 : vector<8x8xbf16> to vector<1x1x8x8xbf16>
    tpu.vector_store %arg6[%c0_47, %c3_48, %c0_49, %c0_50], %70 {strides = array<i32>} : memref<1x4x8x8xbf16, #tpu.memory_space<vmem>>, vector<1x1x8x8xbf16>,
    %71 = vector.extract_strided_slice %7 {offsets = [0, 88], sizes = [8, 8], strides = [1, 1]} : vector<8x96xf32> to vector<8x8xf32>
    %72 = arith.truncf %71 : vector<8x8xf32> to vector<8x8xbf16>
    %c0_51 = arith.constant 0 : index
    %c3_52 = arith.constant 3 : index
    %c0_53 = arith.constant 0 : index
    %c0_54 = arith.constant 0 : index
    %73 = vector.load %arg7[%c0_51, %c3_52, %c0_53, %c0_54] : memref<1x4x8x8xbf16, #tpu.memory_space<vmem>>, vector<1x1x8x8xbf16>
    %74 = vector.shape_cast %73 : vector<1x1x8x8xbf16> to vector<8x8xbf16>
    %75 = vector.shape_cast %72 : vector<8x8xbf16> to vector<1x1x8x8xbf16>
    tpu.vector_store %arg7[%c0_51, %c3_52, %c0_53, %c0_54], %75 {strides = array<i32>} : memref<1x4x8x8xbf16, #tpu.memory_space<vmem>>, vector<1x1x8x8xbf16>,
    return
  }
  func.func @transform_0(%arg0: i32, %arg1: i32) -> (i32, i32, i32) {
    %c0_i32 = arith.constant 0 : i32
    %c0_i32_0 = arith.constant 0 : i32
    return %arg0, %arg1, %c0_i32 : i32, i32, i32
  }
  func.func @transform_1(%arg0: i32, %arg1: i32) -> (i32, i32) {
    %c0_i32 = arith.constant 0 : i32
    %c0_i32_0 = arith.constant 0 : i32
    %c0_i32_1 = arith.constant 0 : i32
    return %c0_i32, %c0_i32_0 : i32, i32
  }
  func.func @transform_2(%arg0: i32, %arg1: i32) -> (i32, i32) {
    %c0_i32 = arith.constant 0 : i32
    %c0_i32_0 = arith.constant 0 : i32
    %c0_i32_1 = arith.constant 0 : i32
    return %c0_i32, %c0_i32_0 : i32, i32
  }
  func.func @transform_3(%arg0: i32, %arg1: i32) -> (i32, i32, i32, i32) {
    %c0_i32 = arith.constant 0 : i32
    %c0_i32_0 = arith.constant 0 : i32
    %c0_i32_1 = arith.constant 0 : i32
    return %arg0, %c0_i32, %arg1, %c0_i32_0 : i32, i32, i32, i32
  }
  func.func @transform_4(%arg0: i32, %arg1: i32) -> (i32, i32, i32, i32) {
    %c0_i32 = arith.constant 0 : i32
    %c0_i32_0 = arith.constant 0 : i32
    %c0_i32_1 = arith.constant 0 : i32
    return %arg0, %c0_i32, %arg1, %c0_i32_0 : i32, i32, i32, i32
  }
  func.func @transform_5(%arg0: i32, %arg1: i32) -> (i32, i32, i32, i32) {
    %c0_i32 = arith.constant 0 : i32
    %c0_i32_0 = arith.constant 0 : i32
    %c0_i32_1 = arith.constant 0 : i32
    return %arg0, %c0_i32, %arg1, %c0_i32_0 : i32, i32, i32, i32
  }
}

</mosaic_0001>

<llo_original>
// kernel: tpu_custom_call.1
$region0: #{tpu_custom_call.1}
  #allocation0 [shape = 'u32[]', space=smem, size = 0x4, offset = 0x4, fixed_abs, tag = 'smem constant byte address 0x4 - core index']
  #allocation1 [shape = 'u32[144,128]{1,0:T(1,128)}', space=vmem, size = 0x12000, scoped, tag = 'internal scratch']
  %s0 = inlined_call_operand.hbm [shape: f32[2,8,32], index: 0, kind: input, shape index: {}]
  %s1 = inlined_call_operand.hbm [shape: bf16[32,96], index: 1, kind: input, shape index: {}]
  %s2 = inlined_call_operand.vmem [shape: f32[1,96], index: 2, kind: input, shape index: {}]
  %s3 = inlined_call_operand.hbm [shape: bf16[2,4,8,8], index: 3, kind: output, shape index: {0}]
  %s4 = inlined_call_operand.hbm [shape: bf16[2,4,8,8], index: 4, kind: output, shape index: {1}]
  %s5 = inlined_call_operand.hbm [shape: bf16[2,4,8,8], index: 5, kind: output, shape index: {2}]
  %6 = xla_tuple %s3, %s4, %s5
  %s7 = sld [smem:[#allocation0]]
  $region69: #{tpu_custom_call.1} parent=0
    _
  %s9 = ssub.s32 1, %s7
  %s10 = scalar_select 0, %s9, %s7
  $region1: #{tpu_custom_call.1} parent=0
    #allocation2 [shape = 'u8[8192]{0}', space=vmem, size = 0x2000, scoped, tag = 'input window, operand 0']
    #allocation3 [shape = 's32[2]{0}', space=sflag, size = 0x8, scoped, tag = 'scoped memory for tpu_custom_call.1']
    #allocation4 [shape = 's32[2]{0}', space=sflag, size = 0x8, scoped, tag = 'scoped memory for tpu_custom_call.1']
    #allocation5 [shape = 'u8[8192]{0}', space=vmem, size = 0x2000, scoped, tag = 'input window, operand 1, single buffered']
    #allocation6 [shape = 's32[1]{0}', space=sflag, size = 0x4, scoped, tag = 'scoped memory for tpu_custom_call.1']
    #allocation7 [shape = 'u8[16384]{0}', space=vmem, size = 0x4000, scoped, tag = 'output window, operand 0']
    #allocation8 [shape = 'u8[16384]{0}', space=vmem, size = 0x4000, scoped, tag = 'output window, operand 1']
    #allocation9 [shape = 's32[2]{0}', space=sflag, size = 0x8, scoped, tag = 'scoped memory for tpu_custom_call.1']
    #allocation10 [shape = 'u8[16384]{0}', space=vmem, size = 0x4000, scoped, tag = 'output window, operand 2']
    %11 = vsyncpa [#allocation3], 0
    %s12 = scalar_lea.sflag [#allocation3], 1
    %13 = vsyncpa %s12, 0
    %14 = vsyncpa [#allocation6], 0
    %15 = vsyncpa [#allocation4], 0
    %s16 = scalar_lea.sflag [#allocation4], 1
    %17 = vsyncpa %s16, 0
    %18 = vsyncpa [#allocation9], 0
    %s19 = scalar_lea.sflag [#allocation9], 1
    %20 = vsyncpa %s19, 0
    loop: start=0, step=1, limit=4
    $region2: #{tpu_custom_call.1} parent=1 // loop_pre_header
      _
    $region3: #{tpu_custom_call.1} parent=1 // loop_header
      %s22 = sphi 0, %s26
      %p23 = scmp.ge.s32.totalorder %s22, 4
      %s29 = sphi 0, %s41
      %s30 = sphi 0, %s37
      %s31 = sphi 0, %s29
      %s32 = sphi 0, %s30
      %s33 = sphi 0, %s31
      %s34 = sphi 0, %s32
      %s46 = sphi 0, %s48
      %s49 = sphi 0, %s46
      %s50 = sphi 0, %s49
      %s66 = sphi 0, %s50
      %s70 = sphi 0, %s70
      %s72 = sphi 0, %s70
      %s73 = sphi 0, %s72
      %s87 = sphi 0, %s73
      %s91 = sphi 0, %s91
      %s93 = sphi 0, %s91
      %s94 = sphi 0, %s93
      %s108 = sphi 0, %s94
      %s116 = sphi 0, %s118
      %s119 = sphi 0, %s116
      %s120 = sphi 0, %s119
      %s136 = sphi 0, %s120
      %s144 = sphi 0, %s146
      %s147 = sphi 0, %s144
      %s148 = sphi 0, %s147
      %s164 = sphi 0, %s148
      %s172 = sphi 0, %s174
      %s175 = sphi 0, %s172
      %s176 = sphi 0, %s175
      %s192 = sphi 0, %s176
    $region4: #{tpu_custom_call.1} parent=1 // loop_header_branch
      %25 = sbr.rel (%p23) target = $region8
    $region5: #{tpu_custom_call.1} parent=1 // loop_body
      %s27 = ssub.s32 %s22, 1
      %s28 = ssub.s32 %s22, 2
      %s35 = sadd.s32 1, %s30
      %p36 = scmp.ge.s32.totalorder %s35, 1
      %s37 = scalar_select %p36, 0, %s35
      %s38 = sadd.s32 1, %s29
      %s39 = scalar_select %p36, %s38, %s29
      %p40 = scmp.ge.s32.totalorder %s39, 2
      %s41 = scalar_select %p40, 0, %s39
      %s42 = ssub.s32 %s29, %s41
      %s43 = ssub.s32 %s30, %s37
      %s44 = sor.u32 %s42, %s43
      %p45 = scmp.eq.s32.totalorder %s44, 0
      %s47 = sadd.s32 %s46, 1
      %s48 = scalar_select %p45, %s46, %s47
      %p51 = pneg %p45
      %p52 = scmp.eq.s32.totalorder %s22, 1
      %p53 = por %p51, %p52
      %p54 = scmp.ne.s32.totalorder %s46, %s49
      %p55 = scmp.eq.s32.totalorder %s22, 0
      %p56 = por %p54, %p55
      %p57 = scmp.ne.s32.totalorder %s46, %s49
      %p58 = scmp.eq.s32.totalorder %s27, 1
      %p59 = por %p57, %p58
      %p60 = scmp.ne.s32.totalorder %s49, %s50
      %p61 = scmp.eq.s32.totalorder %s27, 0
      %p62 = por %p60, %p61
      %p63 = scmp.ne.s32.totalorder %s49, %s50
      %p64 = scmp.eq.s32.totalorder %s28, 1
      %p65 = por %p63, %p64
      %p67 = scmp.ne.s32.totalorder %s50, %s66
      %p68 = scmp.eq.s32.totalorder %s28, 0
      %p69 = por %p67, %p68
      %s71 = sadd.s32 %s70, 1
      %p74 = scmp.eq.s32.totalorder %s22, 1
      %p75 = scmp.ne.s32.totalorder %s70, %s72
      %p76 = scmp.eq.s32.totalorder %s22, 0
      %p77 = por %p75, %p76
      %p78 = scmp.ne.s32.totalorder %s70, %s72
      %p79 = scmp.eq.s32.totalorder %s27, 1
      %p80 = por %p78, %p79
      %p81 = scmp.ne.s32.totalorder %s72, %s73
      %p82 = scmp.eq.s32.totalorder %s27, 0
      %p83 = por %p81, %p82
      %p84 = scmp.ne.s32.totalorder %s72, %s73
      %p85 = scmp.eq.s32.totalorder %s28, 1
      %p86 = por %p84, %p85
      %p88 = scmp.ne.s32.totalorder %s73, %s87
      %p89 = scmp.eq.s32.totalorder %s28, 0
      %p90 = por %p88, %p89
      %s92 = sadd.s32 %s91, 1
      %p95 = scmp.eq.s32.totalorder %s22, 1
      %p96 = scmp.ne.s32.totalorder %s91, %s93
      %p97 = scmp.eq.s32.totalorder %s22, 0
      %p98 = por %p96, %p97
      %p99 = scmp.ne.s32.totalorder %s91, %s93
      %p100 = scmp.eq.s32.totalorder %s27, 1
      %p101 = por %p99, %p100
      %p102 = scmp.ne.s32.totalorder %s93, %s94
      %p103 = scmp.eq.s32.totalorder %s27, 0
      %p104 = por %p102, %p103
      %p105 = scmp.ne.s32.totalorder %s93, %s94
      %p106 = scmp.eq.s32.totalorder %s28, 1
      %p107 = por %p105, %p106
      %p109 = scmp.ne.s32.totalorder %s94, %s108
      %p110 = scmp.eq.s32.totalorder %s28, 0
      %p111 = por %p109, %p110
      %s112 = ssub.s32 %s29, %s41
      %s113 = ssub.s32 %s30, %s37
      %s114 = sor.u32 %s112, %s113
      %p115 = scmp.eq.s32.totalorder %s114, 0
      %s117 = sadd.s32 %s116, 1
      %s118 = scalar_select %p115, %s116, %s117
      %p121 = pneg %p115
      %p122 = scmp.eq.s32.totalorder %s22, 1
      %p123 = por %p121, %p122
      %p124 = scmp.ne.s32.totalorder %s116, %s119
      %p125 = scmp.eq.s32.totalorder %s22, 0
      %p126 = por %p124, %p125
      %p127 = scmp.ne.s32.totalorder %s116, %s119
      %p128 = scmp.eq.s32.totalorder %s27, 1
      %p129 = por %p127, %p128
      %p130 = scmp.ne.s32.totalorder %s119, %s120
      %p131 = scmp.eq.s32.totalorder %s27, 0
      %p132 = por %p130, %p131
      %p133 = scmp.ne.s32.totalorder %s119, %s120
      %p134 = scmp.eq.s32.totalorder %s28, 1
      %p135 = por %p133, %p134
      %p137 = scmp.ne.s32.totalorder %s120, %s136
      %p138 = scmp.eq.s32.totalorder %s28, 0
      %p139 = por %p137, %p138
      %s140 = ssub.s32 %s29, %s41
      %s141 = ssub.s32 %s30, %s37
      %s142 = sor.u32 %s140, %s141
      %p143 = scmp.eq.s32.totalorder %s142, 0
      %s145 = sadd.s32 %s144, 1
      %s146 = scalar_select %p143, %s144, %s145
      %p149 = pneg %p143
      %p150 = scmp.eq.s32.totalorder %s22, 1
      %p151 = por %p149, %p150
      %p152 = scmp.ne.s32.totalorder %s144, %s147
      %p153 = scmp.eq.s32.totalorder %s22, 0
      %p154 = por %p152, %p153
      %p155 = scmp.ne.s32.totalorder %s144, %s147
      %p156 = scmp.eq.s32.totalorder %s27, 1
      %p157 = por %p155, %p156
      %p158 = scmp.ne.s32.totalorder %s147, %s148
      %p159 = scmp.eq.s32.totalorder %s27, 0
      %p160 = por %p158, %p159
      %p161 = scmp.ne.s32.totalorder %s147, %s148
      %p162 = scmp.eq.s32.totalorder %s28, 1
      %p163 = por %p161, %p162
      %p165 = scmp.ne.s32.totalorder %s148, %s164
      %p166 = scmp.eq.s32.totalorder %s28, 0
      %p167 = por %p165, %p166
      %s168 = ssub.s32 %s29, %s41
      %s169 = ssub.s32 %s30, %s37
      %s170 = sor.u32 %s168, %s169
      %p171 = scmp.eq.s32.totalorder %s170, 0
      %s173 = sadd.s32 %s172, 1
      %s174 = scalar_select %p171, %s172, %s173
      %p177 = pneg %p171
      %p178 = scmp.eq.s32.totalorder %s22, 1
      %p179 = por %p177, %p178
      %p180 = scmp.ne.s32.totalorder %s172, %s175
      %p181 = scmp.eq.s32.totalorder %s22, 0
      %p182 = por %p180, %p181
      %p183 = scmp.ne.s32.totalorder %s172, %s175
      %p184 = scmp.eq.s32.totalorder %s27, 1
      %p185 = por %p183, %p184
      %p186 = scmp.ne.s32.totalorder %s175, %s176
      %p187 = scmp.eq.s32.totalorder %s27, 0
      %p188 = por %p186, %p187
      %p189 = scmp.ne.s32.totalorder %s175, %s176
      %p190 = scmp.eq.s32.totalorder %s28, 1
      %p191 = por %p189, %p190
      %p193 = scmp.ne.s32.totalorder %s176, %s192
      %p194 = scmp.eq.s32.totalorder %s28, 0
      %p195 = por %p193, %p194
      %p196 = scmp.le.s32.totalorder 1, %s22
      %p197 = scmp.lt.s32.totalorder %s22, 3
      %p198 = pnand %p196, %p197
      %p199 = pneg %p198
      // Predicated region
      $region9: #{tpu_custom_call.1} parent=5 // pred_check
        _
      $region10: #{tpu_custom_call.1} parent=5 // pred_check_branch
        %201 = sbr.rel (%p198) target = $region12
      $region11: #{tpu_custom_call.1} parent=5 // pred_region
        %s202 = ssub.s32 %s22, 1
        // Predicated region
        $region13: #{tpu_custom_call.1} parent=11 // pred_check
          %p203 = pneg %p83
        $region14: #{tpu_custom_call.1} parent=11 // pred_check_branch
          %205 = sbr.rel (%p203) target = $region16
        $region15: #{tpu_custom_call.1} parent=11 // pred_region
          %s207 = ssub.s32 256, 256
          %208 = vsyncadd [#allocation6], %s207
          %s209 = sshll.u32 [#allocation5], 4
          %s210 = int_to_ptr.vmem [resolvable:$true] %s209
          %215 = dma.hbm_to_vmem [thread:$0]  %s1, 256, %s210, [#allocation6], 64, 64, 4
        $region16: #{tpu_custom_call.1} parent=11 // pred_fallthru
          _
        // Predicated region
        $region17: #{tpu_custom_call.1} parent=11 // pred_check
          %p216 = pneg %p104
        $region18: #{tpu_custom_call.1} parent=11 // pred_check_branch
          %218 = sbr.rel (%p216) target = $region20
        $region19: #{tpu_custom_call.1} parent=11 // pred_region
          _
        $region20: #{tpu_custom_call.1} parent=11 // pred_fallthru
          _
      $region12: #{tpu_custom_call.1} parent=5 // pred_fallthru
        _
      %p219 = scmp.lt.s32.totalorder %s22, 2
      // Predicated region
      $region21: #{tpu_custom_call.1} parent=5 // pred_check
        %p220 = pneg %p219
      $region22: #{tpu_custom_call.1} parent=5 // pred_check_branch
        %222 = sbr.rel (%p220) target = $region24
      $region23: #{tpu_custom_call.1} parent=5 // pred_region
        // Predicated region
        $region25: #{tpu_custom_call.1} parent=23 // pred_check
          %p223 = pneg %p56
        $region26: #{tpu_custom_call.1} parent=23 // pred_check_branch
          %225 = sbr.rel (%p223) target = $region28
        $region27: #{tpu_custom_call.1} parent=23 // pred_region
          %s226 = sand.u32 %s46, 1
          %s227 = scalar_lea.sflag [#allocation3], %s226
          %s228 = sand.u32 %s46, 1
          %s229 = smul.addr %s228, 8
          %s230 = scalar_lea.vmem [#allocation2], %s229
          %s232 = ssub.s32 128, 128
          %233 = vsyncadd %s227, %s232
          %s234 = sadd.s32 %s30, %s29
          %s235 = smul.addr %s234, 128
          %s236 = scalar_lea.hbm %s0, %s235
          %s238 = sshll.u32 %s230, 4
          %s239 = int_to_ptr.vmem [resolvable:$true] %s238
          %241 = dma.hbm_to_vmem [thread:$0]  %s236, 128, %s239, %s227
        $region28: #{tpu_custom_call.1} parent=23 // pred_fallthru
          _
      $region24: #{tpu_custom_call.1} parent=5 // pred_fallthru
        _
      %p242 = scmp.le.s32.totalorder 1, %s22
      %p243 = scmp.lt.s32.totalorder %s22, 3
      %p244 = pnand %p242, %p243
      %p245 = pneg %p244
      // Predicated region
      $region29: #{tpu_custom_call.1} parent=5 // pred_check
        _
      $region30: #{tpu_custom_call.1} parent=5 // pred_check_branch
        %247 = sbr.rel (%p244) target = $region32
      $region31: #{tpu_custom_call.1} parent=5 // pred_region
        %s248 = ssub.s32 %s22, 1
        %s249 = sand.u32 %s49, 1
        %s250 = scalar_lea.sflag [#allocation3], %s249
        %s251 = sand.u32 %s49, 1
        %s252 = smul.addr %s251, 8
        %s253 = scalar_lea.vmem [#allocation2], %s252
        // Predicated region
        $region33: #{tpu_custom_call.1} parent=31 // pred_check
          %p254 = pneg %p62
        $region34: #{tpu_custom_call.1} parent=31 // pred_check_branch
          %256 = sbr.rel (%p254) target = $region36
        $region35: #{tpu_custom_call.1} parent=31 // pred_region
          %257 = dma.done %s250, 128
        $region36: #{tpu_custom_call.1} parent=31 // pred_fallthru
          _
        // Predicated region
        $region37: #{tpu_custom_call.1} parent=31 // pred_check
          %p258 = pneg %p83
        $region38: #{tpu_custom_call.1} parent=31 // pred_check_branch
          %260 = sbr.rel (%p258) target = $region40
        $region39: #{tpu_custom_call.1} parent=31 // pred_region
          %261 = dma.done [#allocation6], 256
        $region40: #{tpu_custom_call.1} parent=31 // pred_fallthru
          _
        %s262 = sand.u32 %s49, 1
        %s263 = scalar_lea.sflag [#allocation3], %s262
        %s264 = sand.u32 %s49, 1
        %s265 = smul.addr %s264, 8
        %s266 = scalar_lea.vmem [#allocation2], %s265
        %p267 = pneg %p62
        %p268 = pneg %p59
        %p269 = pneg %p83
        %p270 = pneg %p80
        %p271 = pneg %p104
        %p272 = pneg %p101
        %p273 = pneg %p132
        %p274 = pneg %p129
        %s275 = sand.u32 %s119, 1
        %s276 = scalar_lea.sflag [#allocation4], %s275
        %s277 = sand.u32 %s119, 1
        %s278 = smul.addr %s277, 16
        %s279 = scalar_lea.vmem [#allocation7], %s278
        %p280 = pneg %p160
        %p281 = pneg %p157
        %s282 = sand.u32 %s27, 1
        %s283 = scalar_lea.sflag [#allocation9], %s282
        %s284 = sand.u32 %s147, 1
        %s285 = smul.addr %s284, 16
        %s286 = scalar_lea.vmem [#allocation8], %s285
        %p287 = pneg %p188
        %p288 = pneg %p185
        %s289 = sand.u32 %s27, 1
        %s290 = scalar_lea.sflag [#allocation9], %s289
        %s291 = sand.u32 %s175, 1
        %s292 = smul.addr %s291, 16
        %s293 = scalar_lea.vmem [#allocation10], %s292
        %v295 = vld [vmem:[%s253] sm:$0xff]
        %v296 = vpack.c.bf16 %v295, %v295
        %v297 = vld [vmem:[#allocation5] sm:$0xf]
        %v298 = vld [vmem:[#allocation5 + $0x4] sm:$0xf]
        %v299 = vld [vmem:[#allocation5 + $0x8] sm:$0xf]
        %v300 = vld [vmem:[#allocation5 + $0xc] sm:$0xf]
        %v301 = vld [vmem:[%s2] sm:$0x1]
        %v303 = vlaneseq
        %v304 = vshrl.u32 %v303, 7
        %v305 = vsub.s32 0, %v304
        %v306 = vrot.slane %v301, %v305
        %v312 = vunpack.c.l.b16 %v297
        %v313 = vunpack.c.l.b16 %v298
        %v314 = vunpack.c.l.b16 %v299
        %v315 = vunpack.c.l.b16 %v300
        %v316 = vpack.c.b16 %v313, %v312
        %v317 = vpack.c.b16 %v315, %v314
        %vm320 = vcmask 261120
        %v322 = vsel %vm320, %v296, 0
        %324 = vmatprep.subr.bf16.mxu0 0
        %325 = vmatpush1.bf16.msra.mxu0 %v316
        %326 = vmatprep.subr.bf16.mxu0 0
        %327 = vmatpush1.bf16.msra.mxu0 %v317
        %328 = vmatprep.subr.bf16.mxu0 0
        %329 = vmatpush1.bf16.msra.mxu0 0
        %330 = vmatprep.subr.bf16.mxu0 0
        %331 = vmatpush1.bf16.msra.mxu0 0
        %332 = vmatprep.subr.bf16.mxu0 0
        %333 = vmatpush1.bf16.msra.mxu0 0
        %334 = vmatprep.subr.bf16.mxu0 0
        %335 = vmatpush1.bf16.msra.mxu0 0
        %336 = vmatprep.subr.bf16.mxu0 0
        %337 = vmatpush1.bf16.msra.mxu0 0
        %338 = vmatprep.subr.bf16.mxu0 0
        %339 = vmatpush1.bf16.msra.mxu0 0
        %340 = vmatprep.subr.bf16.mxu0 0
        %341 = vmatpush1.bf16.msra.mxu0 0
        %342 = vmatprep.subr.bf16.mxu0 0
        %343 = vmatpush1.bf16.msra.mxu0 0
        %344 = vmatprep.subr.bf16.mxu0 0
        %345 = vmatpush1.bf16.msra.mxu0 0
        %346 = vmatprep.subr.bf16.mxu0 0
        %347 = vmatpush1.bf16.msra.mxu0 0
        %348 = vmatprep.subr.bf16.mxu0 0
        %349 = vmatpush1.bf16.msra.mxu0 0
        %350 = vmatprep.subr.bf16.mxu0 0
        %351 = vmatpush1.bf16.msra.mxu0 0
        %352 = vmatprep.subr.bf16.mxu0 0
        %353 = vmatpush1.bf16.msra.mxu0 0
        %354 = vmatprep.subr.bf16.mxu0 0
        %355 = vmatpush1.bf16.msra.mxu0 0
        %356 = vmatprep.mubr.bf16.mxu0 0
        %357 = vmatmul.mubr.bf16.gmra.mrb[0].mxu0 %v322
        %v358 = vpop.f32.mrb[0].mxu0
        %v359 = vadd.f32 %v306, %v358
        %v360 = vpop.f32.mrb[0].mxu0
        %v361 = vpop.f32.mrb[0].mxu0
        %v362 = vpop.f32.mrb[0].mxu0
        %363 = vdwg.mxu0
        %v364 = vmul.f32 %v359, 0.35355338
        %v365 = vpack.c.bf16 %v364, %v364
        %vm366 = vcmask 60416
        %367 = vst.msk [vmem:[%s279] sm:$0xf] %vm366, %v365
        %v368 = vpack.c.bf16 %v359, %v359
        %v370 = vunpack.c.l.b16 %v368
        %v371 = vpack.c.b16 %v370, %v370
        %372 = vrot.lane.b32.xlu0 %v371, 96
        %v373 = vpop.permute.xlu0 %372
        %375 = vst.msk [vmem:[%s286] sm:$0xf] %vm366, %v373
        %376 = vrot.lane.b32.xlu0 %v371, 64
        %v377 = vpop.permute.xlu0 %376
        %379 = vst.msk [vmem:[%s293] sm:$0xf] %vm366, %v377
        %v381 = vunpack.c.l.b16 %v365
        %v382 = vpack.c.b16 %v381, %v381
        %383 = vrot.lane.b32.xlu0 %v382, 120
        %v384 = vpop.permute.xlu0 %383
        %s386 = scalar_lea.vmem %s279, 4 [#allocation7]
        %387 = vst.msk [vmem:[%s386] sm:$0xf] %vm366, %v384
        %388 = vrot.lane.b32.xlu0 %v371, 88
        %v389 = vpop.permute.xlu0 %388
        %s391 = scalar_lea.vmem %s286, 4 [#allocation8]
        %392 = vst.msk [vmem:[%s391] sm:$0xf] %vm366, %v389
        %393 = vrot.lane.b32.xlu0 %v371, 56
        %v394 = vpop.permute.xlu0 %393
        %s396 = scalar_lea.vmem %s293, 4 [#allocation10]
        %397 = vst.msk [vmem:[%s396] sm:$0xf] %vm366, %v394
        %398 = vrot.lane.b32.xlu0 %v382, 112
        %v399 = vpop.permute.xlu0 %398
        %s401 = scalar_lea.vmem %s279, 8 [#allocation7]
        %402 = vst.msk [vmem:[%s401] sm:$0xf] %vm366, %v399
        %403 = vrot.lane.b32.xlu0 %v371, 80
        %v404 = vpop.permute.xlu0 %403
        %s406 = scalar_lea.vmem %s286, 8 [#allocation8]
        %407 = vst.msk [vmem:[%s406] sm:$0xf] %vm366, %v404
        %408 = vrot.lane.b32.xlu0 %v371, 48
        %v409 = vpop.permute.xlu0 %408
        %s411 = scalar_lea.vmem %s293, 8 [#allocation10]
        %412 = vst.msk [vmem:[%s411] sm:$0xf] %vm366, %v409
        %413 = vrot.lane.b32.xlu0 %v382, 104
        %v414 = vpop.permute.xlu0 %413
        %s416 = scalar_lea.vmem %s279, 12 [#allocation7]
        %417 = vst.msk [vmem:[%s416] sm:$0xf] %vm366, %v414
        %418 = vrot.lane.b32.xlu0 %v371, 72
        %v419 = vpop.permute.xlu0 %418
        %s421 = scalar_lea.vmem %s286, 12 [#allocation8]
        %422 = vst.msk [vmem:[%s421] sm:$0xf] %vm366, %v419
        %423 = vrot.lane.b32.xlu0 %v371, 40
        %v424 = vpop.permute.xlu0 %423
        %s426 = scalar_lea.vmem %s293, 12 [#allocation10]
        %427 = vst.msk [vmem:[%s426] sm:$0xf] %vm366, %v424
        %s428 = sand.u32 %s119, 1
        %s429 = scalar_lea.sflag [#allocation4], %s428
        %s430 = sand.u32 %s119, 1
        %s431 = smul.addr %s430, 16
        %s432 = scalar_lea.vmem [#allocation7], %s431
        %s433 = sand.u32 %s27, 1
        %s434 = scalar_lea.sflag [#allocation9], %s433
        %s435 = sand.u32 %s147, 1
        %s436 = smul.addr %s435, 16
        %s437 = scalar_lea.vmem [#allocation8], %s436
        %s438 = sand.u32 %s27, 1
        %s439 = scalar_lea.sflag [#allocation9], %s438
        %s440 = sand.u32 %s175, 1
        %s441 = smul.addr %s440, 16
        %s442 = scalar_lea.vmem [#allocation10], %s441
        // Predicated region
        $region41: #{tpu_custom_call.1} parent=31 // pred_check
          %p443 = pneg %p129
        $region42: #{tpu_custom_call.1} parent=31 // pred_check_branch
          %445 = sbr.rel (%p443) target = $region44
        $region43: #{tpu_custom_call.1} parent=31 // pred_region
          %s447 = ssub.s32 256, 256
          %448 = vsyncadd %s429, %s447
          %s449 = smul.addr %s31, 4
          %s450 = sadd.s32 %s32, %s449
          %s451 = smul.addr %s450, 64
          %s452 = scalar_lea.hbm %s3, %s451
          %s453 = sshll.u32 %s432, 4
          %s454 = int_to_ptr.vmem [resolvable:$true] %s453
          %459 = dma.vmem_to_hbm [thread:$0]  %s454, 256, %s452, %s429, 64, 64, 4
        $region44: #{tpu_custom_call.1} parent=31 // pred_fallthru
          _
        // Predicated region
        $region45: #{tpu_custom_call.1} parent=31 // pred_check
          %p460 = pneg %p157
        $region46: #{tpu_custom_call.1} parent=31 // pred_check_branch
          %462 = sbr.rel (%p460) target = $region48
        $region47: #{tpu_custom_call.1} parent=31 // pred_region
          %s464 = ssub.s32 256, 256
          %465 = vsyncadd %s434, %s464
          %s466 = smul.addr %s31, 4
          %s467 = sadd.s32 %s32, %s466
          %s468 = smul.addr %s467, 64
          %s469 = scalar_lea.hbm %s4, %s468
          %s470 = sshll.u32 %s437, 4
          %s471 = int_to_ptr.vmem [resolvable:$true] %s470
          %476 = dma.vmem_to_hbm [thread:$0]  %s471, 256, %s469, %s434, 64, 64, 4
        $region48: #{tpu_custom_call.1} parent=31 // pred_fallthru
          _
        // Predicated region
        $region49: #{tpu_custom_call.1} parent=31 // pred_check
          %p477 = pneg %p185
        $region50: #{tpu_custom_call.1} parent=31 // pred_check_branch
          %479 = sbr.rel (%p477) target = $region52
        $region51: #{tpu_custom_call.1} parent=31 // pred_region
          %s481 = ssub.s32 256, 256
          %482 = vsyncadd %s439, %s481
          %s483 = smul.addr %s31, 4
          %s484 = sadd.s32 %s32, %s483
          %s485 = smul.addr %s484, 64
          %s486 = scalar_lea.hbm %s5, %s485
          %s487 = sshll.u32 %s442, 4
          %s488 = int_to_ptr.vmem [resolvable:$true] %s487
          %493 = dma.vmem_to_hbm [thread:$0]  %s488, 256, %s486, %s439, 64, 64, 4
        $region52: #{tpu_custom_call.1} parent=31 // pred_fallthru
          _
      $region32: #{tpu_custom_call.1} parent=5 // pred_fallthru
        _
      %p494 = scmp.le.s32.totalorder 2, %s22
      // Predicated region
      $region53: #{tpu_custom_call.1} parent=5 // pred_check
        %p495 = pneg %p494
      $region54: #{tpu_custom_call.1} parent=5 // pred_check_branch
        %497 = sbr.rel (%p495) target = $region56
      $region55: #{tpu_custom_call.1} parent=5 // pred_region
        %s498 = ssub.s32 %s22, 2
        // Predicated region
        $region57: #{tpu_custom_call.1} parent=55 // pred_check
          %p499 = pneg %p135
        $region58: #{tpu_custom_call.1} parent=55 // pred_check_branch
          %501 = sbr.rel (%p499) target = $region60
        $region59: #{tpu_custom_call.1} parent=55 // pred_region
          %s502 = sand.u32 %s120, 1
          %s503 = scalar_lea.sflag [#allocation4], %s502
          %s504 = sand.u32 %s120, 1
          %s505 = smul.addr %s504, 16
          %s506 = scalar_lea.vmem [#allocation7], %s505
          %507 = dma.done %s503, 256
        $region60: #{tpu_custom_call.1} parent=55 // pred_fallthru
          _
        // Predicated region
        $region61: #{tpu_custom_call.1} parent=55 // pred_check
          %p508 = pneg %p163
        $region62: #{tpu_custom_call.1} parent=55 // pred_check_branch
          %510 = sbr.rel (%p508) target = $region64
        $region63: #{tpu_custom_call.1} parent=55 // pred_region
          %s511 = sand.u32 %s28, 1
          %s512 = scalar_lea.sflag [#allocation9], %s511
          %s513 = sand.u32 %s148, 1
          %s514 = smul.addr %s513, 16
          %s515 = scalar_lea.vmem [#allocation8], %s514
          %516 = dma.done %s512, 256
        $region64: #{tpu_custom_call.1} parent=55 // pred_fallthru
          _
        // Predicated region
        $region65: #{tpu_custom_call.1} parent=55 // pred_check
          %p517 = pneg %p191
        $region66: #{tpu_custom_call.1} parent=55 // pred_check_branch
          %519 = sbr.rel (%p517) target = $region68
        $region67: #{tpu_custom_call.1} parent=55 // pred_region
          %s520 = sand.u32 %s28, 1
          %s521 = scalar_lea.sflag [#allocation9], %s520
          %s522 = sand.u32 %s176, 1
          %s523 = smul.addr %s522, 16
          %s524 = scalar_lea.vmem [#allocation10], %s523
          %525 = dma.done %s521, 256
        $region68: #{tpu_custom_call.1} parent=55 // pred_fallthru
          _
      $region56: #{tpu_custom_call.1} parent=5 // pred_fallthru
        _
    $region6: #{tpu_custom_call.1} parent=1 // loop_footer
      %s26 = sadd.s32 1, %s22
    $region7: #{tpu_custom_call.1} parent=1 // loop_footer_branch
      %21 = sbr.rel target = $region3
    $region8: #{tpu_custom_call.1} parent=1 // loop_exit
      _
    %526 = vsyncpa [#allocation3], 1
    %s527 = scalar_lea.sflag [#allocation3], 1
    %528 = vsyncpa %s527, 1
    %529 = vsyncpa [#allocation6], 1
    %530 = vsyncpa [#allocation4], 1
    %s531 = scalar_lea.sflag [#allocation4], 1
    %532 = vsyncpa %s531, 1
    %533 = vsyncpa [#allocation9], 1
    %s534 = scalar_lea.sflag [#allocation9], 1
    %535 = vsyncpa %s534, 1

</llo_original>
